<compile_context>
chip_gen: v5e
topology: v5e:2x2
jax: 0.10.0
libtpu: 0.0.40
codegen_flags: <defaults>
</compile_context>

<pallas_src>
import functools

import jax
import jax.numpy as jnp
from jax.experimental import pallas as pl
from jax.experimental.pallas import tpu as pltpu


# ---------------------------------------------------------------------------
# Kernels
# ---------------------------------------------------------------------------
def _scale_norm_kernel(w_ref, x_ref, o_ref, *, eps, approx):
    # x_ref: (tile_rows, hidden); w_ref: (1, hidden)
    x = x_ref[...].astype(jnp.float32)
    w = w_ref[...].astype(jnp.float32)
    # L2 norm over the last (hidden) dim, keepdim.
    nrm = jnp.sqrt(jnp.sum(x * x, axis=-1, keepdims=True))
    # Per-row reciprocal (tile_rows x 1) -> EUP; leaves two vmuls per element.
    inv = pl.reciprocal(nrm + eps, approx=approx)
    o_ref[...] = ((x * inv) * w).astype(o_ref.dtype)


def _scale_norm_bias_kernel(w_ref, b_ref, x_ref, o_ref, *, eps, approx):
    x = x_ref[...].astype(jnp.float32)
    w = w_ref[...].astype(jnp.float32)
    b = b_ref[...].astype(jnp.float32)
    nrm = jnp.sqrt(jnp.sum(x * x, axis=-1, keepdims=True))
    inv = pl.reciprocal(nrm + eps, approx=approx)
    o_ref[...] = ((x * inv) * w + b).astype(o_ref.dtype)


# ---------------------------------------------------------------------------
# Tile sizing
# ---------------------------------------------------------------------------
# Conservative pipeline budget so the double-buffered tiles (plus in-body f32
# temporaries) fit v7x's 64 MiB VMEM; v5e/v6e (128 MiB) trivially fit too.
_VMEM_BUDGET_BYTES = 28 * 1024 * 1024


def _sublane(dtype) -> int:
    # Sub-32-bit dtypes pack along sublanes: full vreg packing needs
    # 16 rows for 2-byte dtypes, 32 for 1-byte, 8 for 4-byte.
    itemsize = jnp.dtype(dtype).itemsize
    return {4: 8, 2: 16, 1: 32}.get(itemsize, 8)


def _pick_tile_rows(rows, hidden, dtype):
    itemsize = jnp.dtype(dtype).itemsize
    sub = _sublane(dtype)
    # Per tile row: 2x double-buffered input + 2x double-buffered output in
    # the I/O dtype, plus ~2 f32-width temporaries in the kernel body.
    bytes_per_row = hidden * (4 * itemsize + 2 * 4)
    max_rows = max(sub, _VMEM_BUDGET_BYTES // max(bytes_per_row, 1))
    tile = min(1024, max_rows, max(sub, rows))
    tile = max(sub, (tile // sub) * sub)  # sublane-packed tiles
    # Keep >= ~8 grid steps when possible so both v7x TensorCores get work
    # under dimension_semantics=("parallel",) and the DMA pipeline has depth.
    while tile > sub and pl.cdiv(rows, tile) < 8:
        tile = max(sub, (tile // 2 // sub) * sub)
    return tile


# ---------------------------------------------------------------------------
# Wrapper
# ---------------------------------------------------------------------------
def scale_norm(x, weight, bias=None, eps=1e-5, *, tile_rows=None,
               approx_reciprocal=True):
    """ScaleNorm forward: weight * x / (||x||_2 over last dim + eps) [+ bias]."""
    orig_shape = x.shape
    hidden = orig_shape[-1]
    assert weight.shape == (hidden,)

    rows = 1
    for d in orig_shape[:-1]:
        rows *= d
    x2d = x.reshape(rows, hidden)  # free view: row-major flatten of lead dims

    if tile_rows is None:
        tile_rows = _pick_tile_rows(rows, hidden, x.dtype)

    # No host-side pad/slice: Pallas handles the partial last block by
    # dropping out-of-bounds writes; junk tail rows only affect their own
    # (discarded) row norms.
    grid = (pl.cdiv(rows, tile_rows),)

    x_spec = pl.BlockSpec((tile_rows, hidden), lambda i: (i, 0))
    param_spec = pl.BlockSpec((1, hidden), lambda i: (0, 0))
    out_spec = pl.BlockSpec((tile_rows, hidden), lambda i: (i, 0))

    if bias is None:
        kernel = functools.partial(_scale_norm_kernel, eps=eps,
                                   approx=approx_reciprocal)
        in_specs = [param_spec, x_spec]
        args = (weight.reshape(1, hidden), x2d)
    else:
        assert bias.shape == (hidden,)
        kernel = functools.partial(_scale_norm_bias_kernel, eps=eps,
                                   approx=approx_reciprocal)
        in_specs = [param_spec, param_spec, x_spec]
        args = (weight.reshape(1, hidden), bias.reshape(1, hidden), x2d)

    itemsize = jnp.dtype(x.dtype).itemsize
    pipeline_bytes = (4 * itemsize + 2 * 4) * tile_rows * hidden
    vmem_limit = int(min(48 * 1024 * 1024,
                         max(32 * 1024 * 1024, 2 * pipeline_bytes)))

    out2d = pl.pallas_call(
        kernel,
        out_shape=jax.ShapeDtypeStruct((rows, hidden), x.dtype),
        grid_spec=pltpu.PrefetchScalarGridSpec(
            num_scalar_prefetch=0,
            grid=grid,
            in_specs=in_specs,
            out_specs=out_spec,
        ),
        compiler_params=pltpu.CompilerParams(
            dimension_semantics=("parallel",),
            vmem_limit_bytes=vmem_limit,
        ),
    )(*args)

    return out2d.reshape(orig_shape)


def scale_norm_ref(x, weight, bias=None, eps=1e-5):
    nrm = jnp.sqrt(jnp.sum(x.astype(jnp.float32) ** 2, axis=-1, keepdims=True))
    out = weight * x / (nrm + eps)
    if bias is not None:
        out = out + bias
    return out.astype(x.dtype)


if __name__ == "__main__":
    key = jax.random.PRNGKey(0)
    batch, seq, hidden = 2, 8, 32

    x = jax.random.normal(key, (batch, seq, hidden), dtype=jnp.float32)

    # Deterministic params matching reset_parameters(): weight=ones, bias=zeros.
    weight = jnp.ones((hidden,), dtype=jnp.float32)
    bias = jnp.zeros((hidden,), dtype=jnp.float32)  # module default is bias=False

    # bias=False path (module default), approximate reciprocal (EUP).
    out = jax.block_until_ready(scale_norm(x, weight, bias=None, eps=1e-5))
    ref = scale_norm_ref(x, weight, bias=None, eps=1e-5)
    assert jnp.allclose(out, ref, atol=2e-3, rtol=2e-3), "mismatch (no bias)"

    # Exact-reciprocal path, tight tolerance.
    out_exact = jax.block_until_ready(
        scale_norm(x, weight, bias=None, eps=1e-5, approx_reciprocal=False))
    assert jnp.allclose(out_exact, ref, atol=1e-5, rtol=1e-5), "mismatch (exact)"

    # bias=True path.
    out_b = jax.block_until_ready(scale_norm(x, weight, bias=bias, eps=1e-5))
    ref_b = scale_norm_ref(x, weight, bias=bias, eps=1e-5)
    assert jnp.allclose(out_b, ref_b, atol=2e-3, rtol=2e-3), "mismatch (bias)"

    print("KERNEL_OK")
</pallas_src>

<mosaic_0001>
module attributes {stable_mosaic.version = 11 : i64} {
  func.func @_scale_norm_kernel(%arg0: i32, %arg1: memref<1x32xf32, #tpu.memory_space<vmem>>, %arg2: memref<8x32xf32, #tpu.memory_space<vmem>>, %arg3: memref<8x32xf32, #tpu.memory_space<vmem>>) attributes {dimension_semantics = [#tpu.dimension_semantics<parallel>], iteration_bounds = array<i64: 2>, scalar_prefetch = 0 : i64, scratch_operands = 0 : i64, tpu.core_type = #tpu.core_type<tc>, window_params = [{pipeline_mode = #tpu.pipeline_mode<synchronous>, transform_indices = @transform_0, window_bounds = array<i64: 1, 32>}, {transform_indices = @transform_1, window_bounds = array<i64: 8, 32>}, {transform_indices = @transform_2, window_bounds = array<i64: 8, 32>}]} {
    %c0 = arith.constant 0 : index
    %c0_0 = arith.constant 0 : index
    %0 = vector.load %arg2[%c0, %c0_0] : memref<8x32xf32, #tpu.memory_space<vmem>>, vector<8x32xf32>
    %c0_1 = arith.constant 0 : index
    %c0_2 = arith.constant 0 : index
    %1 = vector.load %arg1[%c0_1, %c0_2] : memref<1x32xf32, #tpu.memory_space<vmem>>, vector<1x32xf32>
    %2 = arith.mulf %0, %0 : vector<8x32xf32>
    %cst = arith.constant dense<0.000000e+00> : vector<8xf32>
    %3 = vector.multi_reduction <add>, %2, %cst [1] : vector<8x32xf32> to vector<8xf32>
    %4 = vector.shape_cast %3 : vector<8xf32> to vector<8x1xf32>
    %5 = math.sqrt %4 : vector<8x1xf32>
    %cst_3 = arith.constant 9.99999974E-6 : f32
    %6 = vector.broadcast %cst_3 : f32 to vector<8x1xf32>
    %7 = arith.addf %5, %6 : vector<8x1xf32>
    %8 = tpu.reciprocal %7 {approx = true} : vector<8x1xf32> -> vector<8x1xf32>
    %9 = vector.broadcast %8 : vector<8x1xf32> to vector<8x32xf32>
    %10 = arith.mulf %0, %9 : vector<8x32xf32>
    %11 = vector.broadcast %1 : vector<1x32xf32> to vector<8x32xf32>
    %12 = arith.mulf %10, %11 : vector<8x32xf32>
    %c0_4 = arith.constant 0 : index
    %c0_5 = arith.constant 0 : index
    %13 = vector.load %arg3[%c0_4, %c0_5] : memref<8x32xf32, #tpu.memory_space<vmem>>, vector<8x32xf32>
    tpu.vector_store %arg3[%c0_4, %c0_5], %12 {strides = array<i32>} : memref<8x32xf32, #tpu.memory_space<vmem>>, vector<8x32xf32>,
    return
  }
  func.func @transform_0(%arg0: i32) -> (i32, i32) {
    %c0_i32 = arith.constant 0 : i32
    %c0_i32_0 = arith.constant 0 : i32
    %c0_i32_1 = arith.constant 0 : i32
    return %c0_i32, %c0_i32_0 : i32, i32
  }
  func.func @transform_1(%arg0: i32) -> (i32, i32) {
    %c0_i32 = arith.constant 0 : i32
    %c0_i32_0 = arith.constant 0 : i32
    return %arg0, %c0_i32 : i32, i32
  }
  func.func @transform_2(%arg0: i32) -> (i32, i32) {
    %c0_i32 = arith.constant 0 : i32
    %c0_i32_0 = arith.constant 0 : i32
    return %arg0, %c0_i32 : i32, i32
  }
}

</mosaic_0001>

<llo_original>
// kernel: tpu_custom_call.1
$region0: #{tpu_custom_call.1}
  #allocation0 [shape = 'u32[]', space=smem, size = 0x4, offset = 0x4, fixed_abs, tag = 'smem constant byte address 0x4 - core index']
  #allocation1 [shape = 'u32[72,128]{1,0:T(1,128)}', space=vmem, size = 0x9000, scoped, tag = 'internal scratch']
  %s0 = inlined_call_operand.hbm [shape: f32[1,32], index: 0, kind: input, shape index: {}]
  %s1 = inlined_call_operand.hbm [shape: f32[16,32], index: 1, kind: input, shape index: {}]
  %s2 = inlined_call_operand.hbm [shape: f32[16,32], index: 2, kind: output, shape index: {}]
  %s3 = sld [smem:[#allocation0]]
  $region49: #{tpu_custom_call.1} parent=0
    _
  %s5 = ssub.s32 1, %s3
  %s6 = scalar_select 0, %s5, %s3
  $region1: #{tpu_custom_call.1} parent=0
    #allocation2 [shape = 'u8[512]{0}', space=vmem, size = 0x400, scoped, tag = 'input window, operand 0, single buffered']
    #allocation3 [shape = 's32[2]{0}', space=sflag, size = 0x8, scoped, tag = 'scoped memory for tpu_custom_call.1']
    #allocation4 [shape = 's32[2]{0}', space=sflag, size = 0x8, scoped, tag = 'scoped memory for tpu_custom_call.1']
    #allocation5 [shape = 'u8[8192]{0}', space=vmem, size = 0x2000, scoped, tag = 'input window, operand 1']
    #allocation6 [shape = 's32[2]{0}', space=sflag, size = 0x8, scoped, tag = 'scoped memory for tpu_custom_call.1']
    #allocation7 [shape = 'u8[8192]{0}', space=vmem, size = 0x2000, scoped, tag = 'output window, operand 0']
    %7 = vsyncpa [#allocation3], 0
    %8 = vsyncpa [#allocation6], 0
    %s9 = scalar_lea.sflag [#allocation6], 1
    %10 = vsyncpa %s9, 0
    %11 = vsyncpa [#allocation4], 0
    %s12 = scalar_lea.sflag [#allocation4], 1
    %13 = vsyncpa %s12, 0
    loop: start=0, step=1, limit=4
    $region2: #{tpu_custom_call.1} parent=1 // loop_pre_header
      _
    $region3: #{tpu_custom_call.1} parent=1 // loop_header
      %s15 = sphi 0, %s19
      %p16 = scmp.ge.s32.totalorder %s15, 4
      %s23 = sphi 0, %s23
      %s25 = sphi 0, %s23
      %s26 = sphi 0, %s25
      %s40 = sphi 0, %s26
      %s46 = sphi 0, %s48
      %s49 = sphi 0, %s46
      %s50 = sphi 0, %s49
      %s66 = sphi 0, %s50
      %s72 = sphi 0, %s74
      %s75 = sphi 0, %s72
      %s76 = sphi 0, %s75
      %s92 = sphi 0, %s76
    $region4: #{tpu_custom_call.1} parent=1 // loop_header_branch
      %18 = sbr.rel (%p16) target = $region8
    $region5: #{tpu_custom_call.1} parent=1 // loop_body
      %s20 = ssub.s32 %s15, 1
      %s21 = ssub.s32 %s15, 2
      %s22 = sadd.s32 %s15, 1
      %s24 = sadd.s32 %s23, 1
      %p27 = scmp.eq.s32.totalorder %s15, 1
      %p28 = scmp.ne.s32.totalorder %s23, %s25
      %p29 = scmp.eq.s32.totalorder %s15, 0
      %p30 = por %p28, %p29
      %p31 = scmp.ne.s32.totalorder %s23, %s25
      %p32 = scmp.eq.s32.totalorder %s20, 1
      %p33 = por %p31, %p32
      %p34 = scmp.ne.s32.totalorder %s25, %s26
      %p35 = scmp.eq.s32.totalorder %s20, 0
      %p36 = por %p34, %p35
      %p37 = scmp.ne.s32.totalorder %s25, %s26
      %p38 = scmp.eq.s32.totalorder %s21, 1
      %p39 = por %p37, %p38
      %p41 = scmp.ne.s32.totalorder %s26, %s40
      %p42 = scmp.eq.s32.totalorder %s21, 0
      %p43 = por %p41, %p42
      %s44 = ssub.s32 %s15, %s22
      %p45 = scmp.eq.s32.totalorder %s44, 0
      %s47 = sadd.s32 %s46, 1
      %s48 = scalar_select %p45, %s46, %s47
      %p51 = pneg %p45
      %p52 = scmp.eq.s32.totalorder %s15, 1
      %p53 = por %p51, %p52
      %p54 = scmp.ne.s32.totalorder %s46, %s49
      %p55 = scmp.eq.s32.totalorder %s15, 0
      %p56 = por %p54, %p55
      %p57 = scmp.ne.s32.totalorder %s46, %s49
      %p58 = scmp.eq.s32.totalorder %s20, 1
      %p59 = por %p57, %p58
      %p60 = scmp.ne.s32.totalorder %s49, %s50
      %p61 = scmp.eq.s32.totalorder %s20, 0
      %p62 = por %p60, %p61
      %p63 = scmp.ne.s32.totalorder %s49, %s50
      %p64 = scmp.eq.s32.totalorder %s21, 1
      %p65 = por %p63, %p64
      %p67 = scmp.ne.s32.totalorder %s50, %s66
      %p68 = scmp.eq.s32.totalorder %s21, 0
      %p69 = por %p67, %p68
      %s70 = ssub.s32 %s15, %s22
      %p71 = scmp.eq.s32.totalorder %s70, 0
      %s73 = sadd.s32 %s72, 1
      %s74 = scalar_select %p71, %s72, %s73
      %p77 = pneg %p71
      %p78 = scmp.eq.s32.totalorder %s15, 1
      %p79 = por %p77, %p78
      %p80 = scmp.ne.s32.totalorder %s72, %s75
      %p81 = scmp.eq.s32.totalorder %s15, 0
      %p82 = por %p80, %p81
      %p83 = scmp.ne.s32.totalorder %s72, %s75
      %p84 = scmp.eq.s32.totalorder %s20, 1
      %p85 = por %p83, %p84
      %p86 = scmp.ne.s32.totalorder %s75, %s76
      %p87 = scmp.eq.s32.totalorder %s20, 0
      %p88 = por %p86, %p87
      %p89 = scmp.ne.s32.totalorder %s75, %s76
      %p90 = scmp.eq.s32.totalorder %s21, 1
      %p91 = por %p89, %p90
      %p93 = scmp.ne.s32.totalorder %s76, %s92
      %p94 = scmp.eq.s32.totalorder %s21, 0
      %p95 = por %p93, %p94
      %p96 = scmp.le.s32.totalorder 1, %s15
      %p97 = scmp.lt.s32.totalorder %s15, 3
      %p98 = pnand %p96, %p97
      %p99 = pneg %p98
      // Predicated region
      $region9: #{tpu_custom_call.1} parent=5 // pred_check
        _
      $region10: #{tpu_custom_call.1} parent=5 // pred_check_branch
        %101 = sbr.rel (%p98) target = $region12
      $region11: #{tpu_custom_call.1} parent=5 // pred_region
        %s102 = ssub.s32 %s15, 1
        // Predicated region
        $region13: #{tpu_custom_call.1} parent=11 // pred_check
          %p103 = pneg %p36
        $region14: #{tpu_custom_call.1} parent=11 // pred_check_branch
          %105 = sbr.rel (%p103) target = $region16
        $region15: #{tpu_custom_call.1} parent=11 // pred_region
          %107 = vsyncadd [#allocation3], 0
          %s109 = sshll.u32 %s0, 4
          %s110 = int_to_ptr.hbm [resolvable:$true] %s109
          %s111 = sshll.u32 [#allocation2], 4
          %s112 = int_to_ptr.vmem [resolvable:$true] %s111
          %114 = dma.hbm_to_vmem [thread:$0]  %s110, 16, %s112, [#allocation3]
        $region16: #{tpu_custom_call.1} parent=11 // pred_fallthru
          _
      $region12: #{tpu_custom_call.1} parent=5 // pred_fallthru
        _
      %p115 = scmp.lt.s32.totalorder %s15, 2
      // Predicated region
      $region17: #{tpu_custom_call.1} parent=5 // pred_check
        %p116 = pneg %p115
      $region18: #{tpu_custom_call.1} parent=5 // pred_check_branch
        %118 = sbr.rel (%p116) target = $region20
      $region19: #{tpu_custom_call.1} parent=5 // pred_region
        // Predicated region
        $region21: #{tpu_custom_call.1} parent=19 // pred_check
          %p119 = pneg %p56
        $region22: #{tpu_custom_call.1} parent=19 // pred_check_branch
          %121 = sbr.rel (%p119) target = $region24
        $region23: #{tpu_custom_call.1} parent=19 // pred_region
          %s122 = sand.u32 %s46, 1
          %s123 = scalar_lea.sflag [#allocation6], %s122
          %s124 = sand.u32 %s46, 1
          %s125 = smul.addr %s124, 8
          %s126 = scalar_lea.vmem [#allocation5], %s125
          %128 = vsyncadd %s123, 0
          %s129 = smul.addr %s15, 8
          %s130 = scalar_lea.hbm %s1, %s129
          %s132 = sshll.u32 %s130, 4
          %s133 = int_to_ptr.hbm [resolvable:$true] %s132
          %s134 = sshll.u32 %s126, 4
          %s135 = int_to_ptr.vmem [resolvable:$true] %s134
          %137 = dma.hbm_to_vmem [thread:$0]  %s133, 128, %s135, %s123
        $region24: #{tpu_custom_call.1} parent=19 // pred_fallthru
          _
      $region20: #{tpu_custom_call.1} parent=5 // pred_fallthru
        _
      %p138 = scmp.le.s32.totalorder 1, %s15
      %p139 = scmp.lt.s32.totalorder %s15, 3
      %p140 = pnand %p138, %p139
      %p141 = pneg %p140
      // Predicated region
      $region25: #{tpu_custom_call.1} parent=5 // pred_check
        _
      $region26: #{tpu_custom_call.1} parent=5 // pred_check_branch
        %143 = sbr.rel (%p140) target = $region28
      $region27: #{tpu_custom_call.1} parent=5 // pred_region
        %s144 = ssub.s32 %s15, 1
        // Predicated region
        $region29: #{tpu_custom_call.1} parent=27 // pred_check
          %p145 = pneg %p36
        $region30: #{tpu_custom_call.1} parent=27 // pred_check_branch
          %147 = sbr.rel (%p145) target = $region32
        $region31: #{tpu_custom_call.1} parent=27 // pred_region
          %149 = dma.done [#allocation3], 16
        $region32: #{tpu_custom_call.1} parent=27 // pred_fallthru
          _
        %s150 = sand.u32 %s49, 1
        %s151 = scalar_lea.sflag [#allocation6], %s150
        %s152 = sand.u32 %s49, 1
        %s153 = smul.addr %s152, 8
        %s154 = scalar_lea.vmem [#allocation5], %s153
        // Predicated region
        $region33: #{tpu_custom_call.1} parent=27 // pred_check
          %p155 = pneg %p62
        $region34: #{tpu_custom_call.1} parent=27 // pred_check_branch
          %157 = sbr.rel (%p155) target = $region36
        $region35: #{tpu_custom_call.1} parent=27 // pred_region
          %159 = dma.done %s151, 128
        $region36: #{tpu_custom_call.1} parent=27 // pred_fallthru
          _
        %p160 = pneg %p36
        %p161 = pneg %p33
        %s162 = sand.u32 %s49, 1
        %s163 = scalar_lea.sflag [#allocation6], %s162
        %s164 = sand.u32 %s49, 1
        %s165 = smul.addr %s164, 8
        %s166 = scalar_lea.vmem [#allocation5], %s165
        %p167 = pneg %p62
        %p168 = pneg %p59
        %p169 = pneg %p88
        %p170 = pneg %p85
        %s171 = sand.u32 %s75, 1
        %s172 = scalar_lea.sflag [#allocation4], %s171
        %s173 = sand.u32 %s75, 1
        %s174 = smul.addr %s173, 8
        %s175 = scalar_lea.vmem [#allocation7], %s174
        %v176 = vld [vmem:[%s154] sm:$0xff]
        %v177 = vld [vmem:[#allocation2] sm:$0x1]
        %v178 = vmul.f32 %v176, %v176
        %vm179 = vcmask 261120
        %v180 = vsel %vm179, %v178, 0.0
        %181 = vadd.xlane.f32.xlu0 %v180
        %v182 = vpop.xlane.xlu0 %181
        %v183 = vrsqrt.pop %v182
        %v184 = vmul.f32 %v183, %v182
        %v185 = vmul.f32 %v184, %v183
        %v186 = vmul.f32 0.5, %v185
        %v187 = vsub.f32 1.5, %v186
        %v188 = vmul.f32 %v183, %v187
        %v189 = vmul.f32 %v182, %v188
        %vm190 = vcmp.eq.f32.partialorder %v182, inf
        %v191 = vsel %vm190, %v182, %v189
        %vm192 = vcmp.eq.f32.partialorder %v182, 0.0
        %v193 = vand.u32 %v182, 2147483648
        %v194 = vsel %vm192, %v193, %v191
        %v195 = vadd.f32 %v194, 1e-05
        %v196 = vrcp.pop %v195
        %v197 = vmul.f32 %v176, %v196
        %v199 = vperm.slane %v177, 0
        %v201 = vmul.f32 %v197, %v199
        %202 = vst.msk [vmem:[%s175] sm:$0xff] %vm179, %v201
        %s203 = sand.u32 %s75, 1
        %s204 = scalar_lea.sflag [#allocation4], %s203
        %s205 = sand.u32 %s75, 1
        %s206 = smul.addr %s205, 8
        %s207 = scalar_lea.vmem [#allocation7], %s206
        // Predicated region
        $region37: #{tpu_custom_call.1} parent=27 // pred_check
          %p208 = pneg %p85
        $region38: #{tpu_custom_call.1} parent=27 // pred_check_branch
          %210 = sbr.rel (%p208) target = $region40
        $region39: #{tpu_custom_call.1} parent=27 // pred_region
          %212 = vsyncadd %s204, 0
          %s213 = smul.addr %s20, 8
          %s214 = scalar_lea.hbm %s2, %s213
          %s216 = sshll.u32 %s207, 4
          %s217 = int_to_ptr.vmem [resolvable:$true] %s216
          %s218 = sshll.u32 %s214, 4
          %s219 = int_to_ptr.hbm [resolvable:$true] %s218
          %221 = dma.vmem_to_hbm [thread:$0]  %s217, 128, %s219, %s204
        $region40: #{tpu_custom_call.1} parent=27 // pred_fallthru
          _
      $region28: #{tpu_custom_call.1} parent=5 // pred_fallthru
        _
      %p222 = scmp.le.s32.totalorder 2, %s15
      // Predicated region
      $region41: #{tpu_custom_call.1} parent=5 // pred_check
        %p223 = pneg %p222
      $region42: #{tpu_custom_call.1} parent=5 // pred_check_branch
        %225 = sbr.rel (%p223) target = $region44
      $region43: #{tpu_custom_call.1} parent=5 // pred_region
        %s226 = ssub.s32 %s15, 2
        // Predicated region
        $region45: #{tpu_custom_call.1} parent=43 // pred_check
          %p227 = pneg %p91
        $region46: #{tpu_custom_call.1} parent=43 // pred_check_branch
          %229 = sbr.rel (%p227) target = $region48
        $region47: #{tpu_custom_call.1} parent=43 // pred_region
          %s230 = sand.u32 %s76, 1
          %s231 = scalar_lea.sflag [#allocation4], %s230
          %s232 = sand.u32 %s76, 1
          %s233 = smul.addr %s232, 8
          %s234 = scalar_lea.vmem [#allocation7], %s233
          %236 = dma.done %s231, 128
        $region48: #{tpu_custom_call.1} parent=43 // pred_fallthru
          _
      $region44: #{tpu_custom_call.1} parent=5 // pred_fallthru
        _
    $region6: #{tpu_custom_call.1} parent=1 // loop_footer
      %s19 = sadd.s32 1, %s15
    $region7: #{tpu_custom_call.1} parent=1 // loop_footer_branch
      %14 = sbr.rel target = $region3
    $region8: #{tpu_custom_call.1} parent=1 // loop_exit
      _
    %237 = vsyncpa [#allocation3], 1
    %s238 = scalar_lea.sflag [#allocation3], 1
    %239 = vsyncpa %s238, 1
    %240 = vsyncpa [#allocation6], 1
    %s241 = scalar_lea.sflag [#allocation6], 1
    %242 = vsyncpa %s241, 1
    %243 = vsyncpa [#allocation4], 1
    %s244 = scalar_lea.sflag [#allocation4], 1
    %245 = vsyncpa %s244, 1

</llo_original>
